<compile_context>
chip_gen: v7x
topology: tpu7x:2x2x1
jax: 0.10.0
libtpu: 0.0.40
codegen_flags: <defaults>
</compile_context>

<pallas_src>
import functools

import numpy as np
import jax
import jax.numpy as jnp
from jax.experimental import pallas as pl
from jax.experimental.pallas import tpu as pltpu

_TARGET_BLOCK_BYTES = 4 * 1024 * 1024      # ~4 MiB output tile
_VMEM_LIMIT_BYTES = 48 * 1024 * 1024       # safe on v5e/v6e (128 MiB) and v7x (64 MiB)


def _cdiv(a: int, b: int) -> int:
    return (a + b - 1) // b


def _round_up(x: int, m: int) -> int:
    return ((x + m - 1) // m) * m


def _tiling(B: int, n: int, itemsize: int):
    """Pick (bt, ti, nj) for an output block of shape (bt, ti, nj)."""
    sub_mult = {4: 8, 2: 16, 1: 32}.get(itemsize, 8)   # packed sublane multiple for out dtype
    nj = _round_up(n, 128)                             # lane-dense block width
    row_bytes = nj * itemsize

    # balanced i-tiling: never pad i by more than one tile's worth of rounding
    max_ti = max(sub_mult, (_TARGET_BLOCK_BYTES // row_bytes) // sub_mult * sub_mult)
    n_i_tiles = _cdiv(n, max_ti)
    ti = min(_round_up(_cdiv(n, n_i_tiles), sub_mult), _round_up(n, sub_mult))

    # batch blocking: amortize per-step overhead for small n; no divisor constraint
    per_batch_bytes = ti * row_bytes
    max_bt = max(1, _TARGET_BLOCK_BYTES // per_batch_bytes)
    bt = min(B, max_bt)

    # guarantee >= 2 grid steps along a parallel axis when possible (v7x has 2 TCs)
    if _cdiv(B, bt) * _cdiv(n, ti) < 2:
        if B >= 2:
            bt = _cdiv(B, 2)
        elif n > 2 * sub_mult:
            ti = _round_up(_cdiv(n, 2), sub_mult)
    return bt, ti, nj


def _softsort_kernel(scores_ref, sorted_ref, out_ref, *, pow_):
    # scores_ref: (Bt, 1, NJ)  f32, tau-folded, padded lanes = -inf
    # sorted_ref: (Bt, TI, 1)  f32, tau-folded, descending
    # out_ref:    (Bt, TI, NJ) out_dtype
    s_row = scores_ref[...]
    s_col = sorted_ref[...]
    diff = s_row - s_col                               # (Bt, TI, NJ)

    # pow is a Python static: branch at trace time, avoid pow() -> log+exp on EUP.
    if pow_ == 1.0:
        d = jnp.abs(diff)
    elif pow_ == 2.0:
        d = diff * diff
    else:
        d = jnp.abs(diff) ** pow_

    logits = -d                                        # <= 0; padded lanes -> -inf
    # No max-subtraction needed: each real row attains logit == 0 exactly
    # (sorted values are a permutation of scores).
    e = jnp.exp(logits)                                # exp(-inf) == 0 on padded lanes
    denom = jnp.sum(e, axis=-1, keepdims=True)         # >= 1 on real rows
    # Exact normalization (store-bound kernel -> divide is free); rows sum to 1.
    out_ref[...] = (e / denom).astype(out_ref.dtype)


def _softsort_hard_kernel(idx_ref, out_ref):
    # idx_ref: (Bt, TI, 1) int32 -- original column j of sorted rank i
    # out_ref: (Bt, TI, NJ)      -- one-hot permutation rows
    idx = idx_ref[...]
    jota = jax.lax.broadcasted_iota(jnp.int32, out_ref.shape, 2)
    out_ref[...] = (jota == idx).astype(out_ref.dtype)


def softsort(scores: jax.Array, tau: float = 1.0, hard: bool = False,
             pow: float = 1.0, out_dtype=jnp.bfloat16) -> jax.Array:
    """scores: (B, n) -> (B, n, n) soft permutation matrix (forward pass)."""
    scores = scores.astype(jnp.float32)
    B, n = scores.shape
    itemsize = np.dtype(out_dtype).itemsize

    bt, ti, nj = _tiling(B, n, itemsize)
    grid = (_cdiv(B, bt), _cdiv(n, ti))

    cparams = pltpu.CompilerParams(
        dimension_semantics=("parallel", "parallel"),
        vmem_limit_bytes=_VMEM_LIMIT_BYTES,
    )
    out_shape = jax.ShapeDtypeStruct((B, n, n), out_dtype)   # unpadded: no post-call slice
    out_spec = pl.BlockSpec((bt, ti, nj), lambda b, i: (b, i, 0))

    if hard:
        # Forward value of the straight-through branch == permutation matrix of
        # the descending argsort; no O(n^2) pairwise math needed.
        # TODO(synk): straight-through gradient ((P - P_hat).detach() + P_hat) is a
        # backward-pass trick and is not implemented; exact-tie column selection may
        # differ from torch.topk.
        idx = jnp.argsort(-scores, axis=1).astype(jnp.int32)[..., None]   # (B, n, 1)
        return pl.pallas_call(
            _softsort_hard_kernel,
            out_shape=out_shape,
            grid=grid,
            in_specs=[pl.BlockSpec((bt, ti, 1), lambda b, i: (b, i, 0))],
            out_specs=out_spec,
            compiler_params=cparams,
        )(idx)

    # Fold tau into the tiny O(B*n) inputs:  |a*x - a*y|^p == a^p * |x - y|^p
    # with a = tau^(-1/p), so the kernel drops the per-element scale multiply.
    scale = float(tau) ** (-1.0 / float(pow))
    scores_s = scores * scale
    sorted_s = -jnp.sort(-scores_s, axis=1)[..., None]                    # (B, n, 1) desc

    # Padded j lanes get -inf -> exp() == 0, softmax over real lanes unchanged.
    scores_p = jnp.full((B, 1, nj), -jnp.inf, jnp.float32).at[:, 0, :n].set(scores_s)

    kernel = functools.partial(_softsort_kernel, pow_=float(pow))
    return pl.pallas_call(
        kernel,
        out_shape=out_shape,
        grid=grid,
        in_specs=[
            pl.BlockSpec((bt, 1, nj), lambda b, i: (b, 0, 0)),   # scores: resident over i
            pl.BlockSpec((bt, ti, 1), lambda b, i: (b, i, 0)),   # sorted: sliced per i-tile
        ],
        out_specs=out_spec,
        compiler_params=cparams,
    )(scores_p, sorted_s)


def _softsort_ref(scores, tau=1.0, hard=False, pow=1.0):
    """Pure-JAX reference mirroring the PyTorch forward."""
    scores = scores.astype(jnp.float32)[..., None]            # (B, n, 1)
    sorted_ = -jnp.sort(-scores, axis=1)                      # (B, n, 1) descending
    pairwise = -(jnp.abs(jnp.swapaxes(scores, 1, 2) - sorted_) ** pow) / tau
    p_hat = jax.nn.softmax(pairwise, axis=-1)
    if hard:
        idx = jnp.argmax(p_hat, axis=-1, keepdims=True)
        iota = jax.lax.broadcasted_iota(jnp.int32, p_hat.shape, 2)
        p_hat = jnp.where(iota == idx, 1.0, 0.0)
    return p_hat


if __name__ == "__main__":
    key = jax.random.PRNGKey(0)
    B, n = 2, 16
    scores = jax.random.normal(key, (B, n), dtype=jnp.float32)

    # soft, pow=1, default bf16 output
    out = jax.block_until_ready(softsort(scores, tau=1.0, hard=False, pow=1.0))
    ref = _softsort_ref(scores, tau=1.0, hard=False, pow=1.0)
    assert out.shape == (B, n, n)
    assert jnp.allclose(out.astype(jnp.float32), ref, atol=8e-3, rtol=0), \
        "mismatch vs reference (soft, pow=1, bf16)"
    row_sums = jnp.sum(out.astype(jnp.float32), axis=-1)
    assert jnp.allclose(row_sums, 1.0, atol=1e-2), "rows do not sum to 1 (bf16)"

    # soft, pow=1, f32 output (tight tolerance)
    out32 = jax.block_until_ready(
        softsort(scores, tau=1.0, hard=False, pow=1.0, out_dtype=jnp.float32))
    assert jnp.allclose(out32, ref, atol=1e-4, rtol=0), "mismatch vs reference (soft, f32)"
    assert jnp.allclose(jnp.sum(out32, axis=-1), 1.0, atol=1e-4), "rows do not sum to 1 (f32)"

    # soft, pow=2, different tau
    out2 = jax.block_until_ready(softsort(scores, tau=0.5, hard=False, pow=2.0))
    ref2 = _softsort_ref(scores, tau=0.5, hard=False, pow=2.0)
    assert jnp.allclose(out2.astype(jnp.float32), ref2, atol=8e-3, rtol=0), \
        "mismatch vs reference (soft, pow=2)"

    # hard (forward value only): exact 0/1 one-hot rows
    outh = jax.block_until_ready(softsort(scores, tau=1.0, hard=True, pow=1.0))
    refh = _softsort_ref(scores, tau=1.0, hard=True, pow=1.0)
    assert jnp.allclose(outh.astype(jnp.float32), refh, atol=1e-6), \
        "mismatch vs reference (hard)"

    print("KERNEL_OK")
</pallas_src>

<mosaic_0001>
module attributes {stable_mosaic.version = 11 : i64} {
  func.func @_softsort_kernel(%arg0: i32, %arg1: i32, %arg2: memref<1x1x128xf32, #tpu.memory_space<vmem>>, %arg3: memref<1x16x1xf32, #tpu.memory_space<vmem>>, %arg4: memref<1x16x128xbf16, #tpu.memory_space<vmem>>) attributes {dimension_semantics = [#tpu.dimension_semantics<parallel>, #tpu.dimension_semantics<parallel>], iteration_bounds = array<i64: 2, 1>, scalar_prefetch = 0 : i64, scratch_operands = 0 : i64, tpu.core_type = #tpu.core_type<tc>, window_params = [{transform_indices = @transform_0, window_bounds = array<i64: 1, 1, 128>}, {transform_indices = @transform_1, window_bounds = array<i64: 1, 16, 1>}, {transform_indices = @transform_2, window_bounds = array<i64: 1, 16, 128>}]} {
    %c0 = arith.constant 0 : index
    %c0_0 = arith.constant 0 : index
    %c0_1 = arith.constant 0 : index
    %0 = vector.load %arg2[%c0, %c0_0, %c0_1] : memref<1x1x128xf32, #tpu.memory_space<vmem>>, vector<1x1x128xf32>
    %c0_2 = arith.constant 0 : index
    %c0_3 = arith.constant 0 : index
    %c0_4 = arith.constant 0 : index
    %1 = vector.load %arg3[%c0_2, %c0_3, %c0_4] : memref<1x16x1xf32, #tpu.memory_space<vmem>>, vector<1x16x1xf32>
    %2 = vector.broadcast %0 : vector<1x1x128xf32> to vector<1x16x128xf32>
    %3 = vector.broadcast %1 : vector<1x16x1xf32> to vector<1x16x128xf32>
    %4 = arith.subf %2, %3 : vector<1x16x128xf32>
    %5 = math.absf %4 : vector<1x16x128xf32>
    %cst = arith.constant 0.000000e+00 : f32
    %6 = vector.broadcast %cst : f32 to vector<1x16x128xf32>
    %7 = arith.subf %6, %5 : vector<1x16x128xf32>
    %8 = math.exp %7 : vector<1x16x128xf32>
    %cst_5 = arith.constant dense<0.000000e+00> : vector<1x16xf32>
    %9 = vector.multi_reduction <add>, %8, %cst_5 [2] : vector<1x16x128xf32> to vector<1x16xf32>
    %10 = vector.shape_cast %9 : vector<1x16xf32> to vector<1x16x1xf32>
    %11 = vector.broadcast %10 : vector<1x16x1xf32> to vector<1x16x128xf32>
    %12 = arith.divf %8, %11 : vector<1x16x128xf32>
    %13 = arith.truncf %12 : vector<1x16x128xf32> to vector<1x16x128xbf16>
    %c0_6 = arith.constant 0 : index
    %c0_7 = arith.constant 0 : index
    %c0_8 = arith.constant 0 : index
    %14 = vector.load %arg4[%c0_6, %c0_7, %c0_8] : memref<1x16x128xbf16, #tpu.memory_space<vmem>>, vector<1x16x128xbf16>
    tpu.vector_store %arg4[%c0_6, %c0_7, %c0_8], %13 {strides = array<i32>} : memref<1x16x128xbf16, #tpu.memory_space<vmem>>, vector<1x16x128xbf16>,
    return
  }
  func.func @transform_0(%arg0: i32, %arg1: i32) -> (i32, i32, i32) {
    %c0_i32 = arith.constant 0 : i32
    %c0_i32_0 = arith.constant 0 : i32
    %c0_i32_1 = arith.constant 0 : i32
    return %arg0, %c0_i32, %c0_i32_0 : i32, i32, i32
  }
  func.func @transform_1(%arg0: i32, %arg1: i32) -> (i32, i32, i32) {
    %c0_i32 = arith.constant 0 : i32
    %c0_i32_0 = arith.constant 0 : i32
    return %arg0, %arg1, %c0_i32 : i32, i32, i32
  }
  func.func @transform_2(%arg0: i32, %arg1: i32) -> (i32, i32, i32) {
    %c0_i32 = arith.constant 0 : i32
    %c0_i32_0 = arith.constant 0 : i32
    return %arg0, %arg1, %c0_i32 : i32, i32, i32
  }
}

</mosaic_0001>

<llo_original>
// kernel: tpu_custom_call.1
$region0: #{tpu_custom_call.1}
  #allocation0 [shape = 'u32[]', space=smem, size = 0x4, offset = 0x4, fixed_abs, tag = 'smem constant byte address 0x4 - core index']
  #allocation1 [shape = 'u32[144,128]{1,0:T(1,128)}', space=vmem, size = 0x12000, scoped, tag = 'internal scratch']
  %s0 = inlined_call_operand.vmem [shape: f32[2,1,128], index: 0, kind: input, shape index: {}]
  %s1 = inlined_call_operand.vmem [shape: f32[2,16,1], index: 1, kind: input, shape index: {}]
  %s2 = inlined_call_operand.hbm [shape: bf16[2,16,16], index: 2, kind: output, shape index: {}]
  %s3 = sld [smem:[#allocation0]]
  $region41: #{tpu_custom_call.1} parent=0
    _
  %s5 = ssub.s32 1, %s3
  %s6 = scalar_select 0, %s5, %s3
  $region1: #{tpu_custom_call.1} parent=0
    #allocation2 [shape = 'u8[8192]{0}', space=vmem, size = 0x2000, scoped, tag = 'output window, operand 0']
    #allocation3 [shape = 's32[2]{0}', space=sflag, size = 0x8, scoped, tag = 'scoped memory for tpu_custom_call.1']
    %7 = vsyncpa [#allocation3], 0
    %s8 = scalar_lea.sflag [#allocation3], 1
    %9 = vsyncpa %s8, 0
    loop: start=0, step=1, limit=4
    $region2: #{tpu_custom_call.1} parent=1 // loop_pre_header
      _
    $region3: #{tpu_custom_call.1} parent=1 // loop_header
      %s11 = sphi 0, %s15
      %p12 = scmp.ge.s32.totalorder %s11, 4
      %s18 = sphi 0, %s30
      %s19 = sphi 0, %s26
      %s20 = sphi 0, %s18
      %s21 = sphi 0, %s19
      %s22 = sphi 0, %s20
      %s23 = sphi 0, %s21
      %s33 = sphi 0, %s35
      %s36 = sphi 0, %s33
      %s37 = sphi 0, %s36
      %s53 = sphi 0, %s37
      %s61 = sphi 0, %s63
      %s64 = sphi 0, %s61
      %s65 = sphi 0, %s64
      %s81 = sphi 0, %s65
      %s89 = sphi 0, %s91
      %s92 = sphi 0, %s89
      %s93 = sphi 0, %s92
      %s109 = sphi 0, %s93
    $region4: #{tpu_custom_call.1} parent=1 // loop_header_branch
      %14 = sbr.rel (%p12) target = $region8
    $region5: #{tpu_custom_call.1} parent=1 // loop_body
      %s16 = ssub.s32 %s11, 1
      %s17 = ssub.s32 %s11, 2
      %s24 = sadd.s32 1, %s19
      %p25 = scmp.ge.s32.totalorder %s24, 1
      %s26 = scalar_select %p25, 0, %s24
      %s27 = sadd.s32 1, %s18
      %s28 = scalar_select %p25, %s27, %s18
      %p29 = scmp.ge.s32.totalorder %s28, 2
      %s30 = scalar_select %p29, 0, %s28
      %s31 = ssub.s32 %s18, %s30
      %p32 = scmp.eq.s32.totalorder %s31, 0
      %s34 = sadd.s32 %s33, 1
      %s35 = scalar_select %p32, %s33, %s34
      %p38 = pneg %p32
      %p39 = scmp.eq.s32.totalorder %s11, 1
      %p40 = por %p38, %p39
      %p41 = scmp.ne.s32.totalorder %s33, %s36
      %p42 = scmp.eq.s32.totalorder %s11, 0
      %p43 = por %p41, %p42
      %p44 = scmp.ne.s32.totalorder %s33, %s36
      %p45 = scmp.eq.s32.totalorder %s16, 1
      %p46 = por %p44, %p45
      %p47 = scmp.ne.s32.totalorder %s36, %s37
      %p48 = scmp.eq.s32.totalorder %s16, 0
      %p49 = por %p47, %p48
      %p50 = scmp.ne.s32.totalorder %s36, %s37
      %p51 = scmp.eq.s32.totalorder %s17, 1
      %p52 = por %p50, %p51
      %p54 = scmp.ne.s32.totalorder %s37, %s53
      %p55 = scmp.eq.s32.totalorder %s17, 0
      %p56 = por %p54, %p55
      %s57 = ssub.s32 %s18, %s30
      %s58 = ssub.s32 %s19, %s26
      %s59 = sor.u32 %s57, %s58
      %p60 = scmp.eq.s32.totalorder %s59, 0
      %s62 = sadd.s32 %s61, 1
      %s63 = scalar_select %p60, %s61, %s62
      %p66 = pneg %p60
      %p67 = scmp.eq.s32.totalorder %s11, 1
      %p68 = por %p66, %p67
      %p69 = scmp.ne.s32.totalorder %s61, %s64
      %p70 = scmp.eq.s32.totalorder %s11, 0
      %p71 = por %p69, %p70
      %p72 = scmp.ne.s32.totalorder %s61, %s64
      %p73 = scmp.eq.s32.totalorder %s16, 1
      %p74 = por %p72, %p73
      %p75 = scmp.ne.s32.totalorder %s64, %s65
      %p76 = scmp.eq.s32.totalorder %s16, 0
      %p77 = por %p75, %p76
      %p78 = scmp.ne.s32.totalorder %s64, %s65
      %p79 = scmp.eq.s32.totalorder %s17, 1
      %p80 = por %p78, %p79
      %p82 = scmp.ne.s32.totalorder %s65, %s81
      %p83 = scmp.eq.s32.totalorder %s17, 0
      %p84 = por %p82, %p83
      %s85 = ssub.s32 %s18, %s30
      %s86 = ssub.s32 %s19, %s26
      %s87 = sor.u32 %s85, %s86
      %p88 = scmp.eq.s32.totalorder %s87, 0
      %s90 = sadd.s32 %s89, 1
      %s91 = scalar_select %p88, %s89, %s90
      %p94 = pneg %p88
      %p95 = scmp.eq.s32.totalorder %s11, 1
      %p96 = por %p94, %p95
      %p97 = scmp.ne.s32.totalorder %s89, %s92
      %p98 = scmp.eq.s32.totalorder %s11, 0
      %p99 = por %p97, %p98
      %p100 = scmp.ne.s32.totalorder %s89, %s92
      %p101 = scmp.eq.s32.totalorder %s16, 1
      %p102 = por %p100, %p101
      %p103 = scmp.ne.s32.totalorder %s92, %s93
      %p104 = scmp.eq.s32.totalorder %s16, 0
      %p105 = por %p103, %p104
      %p106 = scmp.ne.s32.totalorder %s92, %s93
      %p107 = scmp.eq.s32.totalorder %s17, 1
      %p108 = por %p106, %p107
      %p110 = scmp.ne.s32.totalorder %s93, %s109
      %p111 = scmp.eq.s32.totalorder %s17, 0
      %p112 = por %p110, %p111
      %p113 = scmp.le.s32.totalorder 1, %s11
      %p114 = scmp.lt.s32.totalorder %s11, 3
      %p115 = pnand %p113, %p114
      %p116 = pneg %p115
      // Predicated region
      $region9: #{tpu_custom_call.1} parent=5 // pred_check
        _
      $region10: #{tpu_custom_call.1} parent=5 // pred_check_branch
        %118 = sbr.rel (%p115) target = $region12
      $region11: #{tpu_custom_call.1} parent=5 // pred_region
        %s119 = ssub.s32 %s11, 1
      $region12: #{tpu_custom_call.1} parent=5 // pred_fallthru
        _
      %p120 = scmp.lt.s32.totalorder %s11, 2
      // Predicated region
      $region13: #{tpu_custom_call.1} parent=5 // pred_check
        %p121 = pneg %p120
      $region14: #{tpu_custom_call.1} parent=5 // pred_check_branch
        %123 = sbr.rel (%p121) target = $region16
      $region15: #{tpu_custom_call.1} parent=5 // pred_region
        // Predicated region
        $region17: #{tpu_custom_call.1} parent=15 // pred_check
          %p124 = pneg %p43
        $region18: #{tpu_custom_call.1} parent=15 // pred_check_branch
          %126 = sbr.rel (%p124) target = $region20
        $region19: #{tpu_custom_call.1} parent=15 // pred_region
          %p127 = scmp.lt.s32.totalorder %s18, 1
          %s128 = scalar_select %p127, %s18, 1
          %s129 = scalar_lea.vmem %s0, %s128
        $region20: #{tpu_custom_call.1} parent=15 // pred_fallthru
          _
        // Predicated region
        $region21: #{tpu_custom_call.1} parent=15 // pred_check
          %p130 = pneg %p71
        $region22: #{tpu_custom_call.1} parent=15 // pred_check_branch
          %132 = sbr.rel (%p130) target = $region24
        $region23: #{tpu_custom_call.1} parent=15 // pred_region
          %s133 = smul.u32 2, %s19
          %p134 = scmp.lt.s32.totalorder %s18, 1
          %s135 = scalar_select %p134, %s18, 1
          %p136 = scmp.lt.s32.totalorder %s133, 1
          %s137 = scalar_select %p136, %s133, 1
          %s138 = smul.addr %s135, 2
          %s139 = sadd.s32 %s137, %s138
          %s140 = smul.addr %s139, 8
          %s141 = scalar_lea.vmem %s1, %s140
          %s142 = smul.u32 2, %s19
        $region24: #{tpu_custom_call.1} parent=15 // pred_fallthru
          _
      $region16: #{tpu_custom_call.1} parent=5 // pred_fallthru
        _
      %p143 = scmp.le.s32.totalorder 1, %s11
      %p144 = scmp.lt.s32.totalorder %s11, 3
      %p145 = pnand %p143, %p144
      %p146 = pneg %p145
      // Predicated region
      $region25: #{tpu_custom_call.1} parent=5 // pred_check
        _
      $region26: #{tpu_custom_call.1} parent=5 // pred_check_branch
        %148 = sbr.rel (%p145) target = $region28
      $region27: #{tpu_custom_call.1} parent=5 // pred_region
        %s149 = ssub.s32 %s11, 1
        %p150 = scmp.lt.s32.totalorder %s20, 1
        %s151 = scalar_select %p150, %s20, 1
        %s152 = scalar_lea.vmem %s0, %s151
        %p153 = pneg %p49
        %p154 = pneg %p46
        %s155 = smul.u32 2, %s21
        %p156 = scmp.lt.s32.totalorder %s20, 1
        %s157 = scalar_select %p156, %s20, 1
        %p158 = scmp.lt.s32.totalorder %s155, 1
        %s159 = scalar_select %p158, %s155, 1
        %s160 = smul.addr %s157, 2
        %s161 = sadd.s32 %s159, %s160
        %s162 = smul.addr %s161, 8
        %s163 = scalar_lea.vmem %s1, %s162
        %p164 = pneg %p77
        %p165 = pneg %p74
        %p166 = pneg %p105
        %p167 = pneg %p102
        %s168 = sand.u32 %s92, 1
        %s169 = scalar_lea.sflag [#allocation3], %s168
        %s170 = sand.u32 %s92, 1
        %s171 = smul.addr %s170, 8
        %s172 = scalar_lea.vmem [#allocation2], %s171
        %p173 = scmp.lt.s32.totalorder %s20, 1
        %s174 = scalar_select %p173, %s20, 1
        %s175 = scalar_lea.vmem %s0, %s174
        %s176 = smul.u32 2, %s21
        %p177 = scmp.lt.s32.totalorder %s20, 1
        %s178 = scalar_select %p177, %s20, 1
        %p179 = scmp.lt.s32.totalorder %s176, 1
        %s180 = scalar_select %p179, %s176, 1
        %s181 = smul.addr %s178, 2
        %s182 = sadd.s32 %s180, %s181
        %s183 = smul.addr %s182, 8
        %s184 = scalar_lea.vmem %s1, %s183
        %s185 = smul.u32 2, %s21
        %s186 = smul.u32 2, %s21
        %v187 = vld [vmem:[%s175] sm:$0x1]
        %v188 = vld [vmem:[%s184] sm:$0xff]
        %v189 = vld [vmem:[%s184 + $0x8] sm:$0xff]
        %v191 = vlaneseq
        %v192 = vshrl.u32 %v191, 7
        %v193 = vsub.s32 0, %v192
        %v194 = vrot.slane %v187, %v193
        %197 = vset.pattern.permute.xlu0 0
        %198 = vperm.xlu0 %197, %v188
        %v199 = vpop.permute.xlu0 %198
        %202 = vset.pattern.permute.xlu0 0
        %203 = vperm.xlu0 %202, %v189
        %v204 = vpop.permute.xlu0 %203
        %v206 = vsub.f32 %v194, %v199
        %v207 = vsub.f32 %v194, %v204
        %v208 = vand.u32 2147483647, %v206
        %v209 = vand.u32 2147483647, %v207
        %v210 = vsub.f32 0.0, %v208
        %v211 = vsub.f32 0.0, %v209
        %v212 = vmul.f32 %v210, 1.442695
        %v213 = vpow.pop %v212
        %v214 = vmul.f32 %v211, 1.442695
        %v215 = vpow.pop %v214
        %216 = vadd.xlane.f32.xlu0 %v213
        %v217 = vpop.xlane.xlu0 %216
        %218 = vadd.xlane.f32.xlu0 %v215
        %v219 = vpop.xlane.xlu0 %218
        %v220 = vrcp.pop %v217
        %v221 = vmul.f32 %v213, %v220
        %v222 = vrcp.pop %v219
        %v223 = vmul.f32 %v215, %v222
        %v224 = vpack.c.bf16 %v223, %v221
        %v226 = vunpack.c.l.b16 %v224
        %v227 = vunpack.c.h.b16 %v224
        %v228 = vpack.c.b16 %v226, %v226
        %v229 = vpack.c.b16 %v227, %v227
        %232 = vst [vmem:[%s172] sm:$0xf] %v228
        %233 = vst [vmem:[%s172 + $0x4] sm:$0xf] %v229
        %s234 = sand.u32 %s92, 1
        %s235 = scalar_lea.sflag [#allocation3], %s234
        %s236 = sand.u32 %s92, 1
        %s237 = smul.addr %s236, 8
        %s238 = scalar_lea.vmem [#allocation2], %s237
        // Predicated region
        $region29: #{tpu_custom_call.1} parent=27 // pred_check
          %p239 = pneg %p102
        $region30: #{tpu_custom_call.1} parent=27 // pred_check_branch
          %241 = sbr.rel (%p239) target = $region32
        $region31: #{tpu_custom_call.1} parent=27 // pred_region
          %s242 = smul.u32 2, %s21
          %s244 = ssub.s32 128, 128
          %245 = vsyncadd %s235, %s244
          %s246 = smul.addr %s20, 2
          %s247 = sadd.s32 %s242, %s246
          %s248 = smul.addr %s247, 64
          %s249 = scalar_lea.hbm %s2, %s248
          %s250 = sshll.u32 %s238, 4
          %s251 = int_to_ptr.vmem [resolvable:$true] %s250
          %256 = dma.vmem_to_hbm [thread:$0]  %s251, 128, %s249, %s235, 64, 64, 4
        $region32: #{tpu_custom_call.1} parent=27 // pred_fallthru
          _
      $region28: #{tpu_custom_call.1} parent=5 // pred_fallthru
        _
      %p257 = scmp.le.s32.totalorder 2, %s11
      // Predicated region
      $region33: #{tpu_custom_call.1} parent=5 // pred_check
        %p258 = pneg %p257
      $region34: #{tpu_custom_call.1} parent=5 // pred_check_branch
        %260 = sbr.rel (%p258) target = $region36
      $region35: #{tpu_custom_call.1} parent=5 // pred_region
        %s261 = ssub.s32 %s11, 2
        // Predicated region
        $region37: #{tpu_custom_call.1} parent=35 // pred_check
          %p262 = pneg %p108
        $region38: #{tpu_custom_call.1} parent=35 // pred_check_branch
          %264 = sbr.rel (%p262) target = $region40
        $region39: #{tpu_custom_call.1} parent=35 // pred_region
          %s265 = sand.u32 %s93, 1
          %s266 = scalar_lea.sflag [#allocation3], %s265
          %s267 = sand.u32 %s93, 1
          %s268 = smul.addr %s267, 8
          %s269 = scalar_lea.vmem [#allocation2], %s268
          %270 = dma.done %s266, 128
        $region40: #{tpu_custom_call.1} parent=35 // pred_fallthru
          _
      $region36: #{tpu_custom_call.1} parent=5 // pred_fallthru
        _
    $region6: #{tpu_custom_call.1} parent=1 // loop_footer
      %s15 = sadd.s32 1, %s11
    $region7: #{tpu_custom_call.1} parent=1 // loop_footer_branch
      %10 = sbr.rel target = $region3
    $region8: #{tpu_custom_call.1} parent=1 // loop_exit
      _
    %271 = vsyncpa [#allocation3], 1
    %s272 = scalar_lea.sflag [#allocation3], 1
    %273 = vsyncpa %s272, 1

</llo_original>
